<compile_context>
chip_gen: v7x
topology: tpu7x:2x2x1
jax: 0.10.0
libtpu: 0.0.40
codegen_flags: <defaults>
</compile_context>

<pallas_src>
import functools

import jax
import jax.numpy as jnp
from jax.experimental import pallas as pl
from jax.experimental.pallas import tpu as pltpu


def _combination_kernel(x1_ref, x3_ref, o_ref):
    x1 = x1_ref[...]                    # (tb, tn)
    a = x3_ref[:, 0:1]                  # (tb, 1) numerator scale
    c = x3_ref[:, 1:2]                  # (tb, 1) denominator scale
    top = x1 * a
    bottom = 1.0 - x1 * c
    # Exact reciprocal runs on the EUP slot; fully hidden under HBM DMA here.
    o_ref[...] = (top * pl.reciprocal(bottom, approx=False)).astype(o_ref.dtype)


@functools.lru_cache(maxsize=None)
def _vmem_tile_budget_bytes():
    """Budget for resident tile bytes: 2 double-buffers x (in tile + out tile)."""
    default = 8 * 1024 * 1024
    try:
        cap = pltpu.get_tpu_info().vmem_capacity_bytes
    except Exception:  # unknown platform / interpret mode -> conservative
        return default
    if cap <= 64 * 1024 * 1024:
        # v7x-class: 64 MiB physical VMEM, 32 MiB scoped default.
        return 20 * 1024 * 1024
    # v5e / v6e-class (128 MiB physical).  Capped at 12 MiB so v5e's 16 MiB
    # scoped default is respected without setting vmem_limit_bytes.
    return 12 * 1024 * 1024


_SMALL_INPUT_BYTES = 1 << 20  # below this, kernel launch overhead dominates


def combination(input1, input2, input3, *,
                small_input_bytes=_SMALL_INPUT_BYTES,
                max_rows_per_block=None,
                max_band_cols_per_block=None):
    """Pallas equivalent of Combination.forward.

    input1: (B, num_bands) float
    input2: unused (kept for signature parity with the PyTorch module)
    input3: (B, >=2); only columns 0 and 1 are consumed
    returns: (B, num_bands)
    """
    del input2  # unused by the original module's forward
    B, num_bands = input1.shape
    dtype = input1.dtype
    itemsize = jnp.dtype(dtype).itemsize

    # Avoid an extra HBM copy when input3 already has exactly 2 columns.
    x3 = input3 if input3.shape[1] == 2 else input3[:, :2]

    # ---- small-input fast path ---------------------------------------------
    if B * num_bands * itemsize <= small_input_bytes:
        a = x3[:, 0:1]
        c = x3[:, 1:2]
        return (input1 * a) / (1.0 - input1 * c)

    # ---- band dimension ------------------------------------------------------
    # Only pad very narrow band dims (<128) so stores are lane-dense; for
    # num_bands >= 128 the full dim is a legal block size (no pad, no slice).
    x1 = input1
    nb_work = num_bands
    if num_bands < 128:
        nb_work = 128
        x1 = jnp.pad(input1, ((0, 0), (0, nb_work - num_bands)))

    tile_budget = _vmem_tile_budget_bytes() // 4  # bytes per single tile

    # Band tile: full dim when it fits (with >=8 rows); else multiples of 128.
    max_tn = max(128, (tile_budget // (8 * itemsize)) // 128 * 128)
    if max_band_cols_per_block is not None:
        max_tn = max(128, min(max_tn, max_band_cols_per_block // 128 * 128))
    tn = nb_work if nb_work <= max_tn else max_tn

    # ---- batch dimension -----------------------------------------------------
    rows_fit = max(8, tile_budget // (tn * itemsize))
    if max_rows_per_block is not None:
        rows_fit = max(8, min(rows_fit, max_rows_per_block))
    if B <= rows_fit:
        tb = B  # whole batch in one row block (block dim == full dim is legal)
    else:
        rows_fit = rows_fit // 8 * 8
        tb = rows_fit
        # Prefer a multiple of 8 that divides B -> no partial boundary block.
        for cand in range(rows_fit, 7, -8):
            if B % cand == 0:
                tb = cand
                break
        # Otherwise the final partial block is masked by Pallas (no jnp.pad).

    grid = (pl.cdiv(B, tb), pl.cdiv(nb_work, tn))

    def build(row_semantics):
        return pl.pallas_call(
            _combination_kernel,
            out_shape=jax.ShapeDtypeStruct((B, nb_work), dtype),
            grid=grid,
            in_specs=[
                pl.BlockSpec((tb, tn), lambda i, j: (i, j)),
                pl.BlockSpec((tb, 2), lambda i, j: (i, 0)),
            ],
            out_specs=pl.BlockSpec((tb, tn), lambda i, j: (i, j)),
            compiler_params=pltpu.CompilerParams(
                dimension_semantics=(row_semantics, pltpu.ARBITRARY)),
        )

    try:
        # CORE_PARALLEL splits the batch axis across TensorCores (v7x has 2 TCs
        # sharing 3.2 TB/s HBM; plain "parallel" may leave one TC idle).
        out = build(pltpu.CORE_PARALLEL)(x1, x3)
    except Exception:
        out = build(pltpu.PARALLEL)(x1, x3)

    if nb_work != num_bands:
        out = out[:, :num_bands]
    return out


def _reference(x1, x3):
    a = x3[:, 0:1]
    c = x3[:, 1:2]
    return (x1 * a) / (1.0 - x1 * c)


if __name__ == "__main__":
    key = jax.random.PRNGKey(0)
    keys = jax.random.split(key, 8)

    # Case 1: module-typical tiny shape -> jnp fast path (launch overhead wins).
    B, nb = 8, 128
    x1 = jax.random.uniform(keys[0], (B, nb), jnp.float32, 0.0, 0.5)
    x2 = jax.random.normal(keys[1], (B, nb), jnp.float32)  # unused, parity only
    x3 = jax.random.uniform(keys[2], (B, 2), jnp.float32, 0.1, 0.9)
    out = jax.block_until_ready(combination(x1, x2, x3))
    assert out.shape == (B, nb)
    assert jnp.allclose(out, _reference(x1, x3), rtol=1e-5, atol=1e-5)

    # Case 2: Pallas path, aligned shapes, single-block grid.
    B2, nb2 = 64, 256
    x1b = jax.random.uniform(keys[3], (B2, nb2), jnp.float32, 0.0, 0.5)
    x3b = jax.random.uniform(keys[4], (B2, 2), jnp.float32, 0.1, 0.9)
    out2 = jax.block_until_ready(combination(x1b, None, x3b, small_input_bytes=0))
    assert out2.shape == (B2, nb2)
    assert jnp.allclose(out2, _reference(x1b, x3b), rtol=1e-5, atol=1e-5)

    # Case 3: Pallas path, misaligned rows AND bands -> masked boundary blocks
    # in both grid dimensions (no jnp.pad on either axis).
    B3, nb3 = 50, 200
    x1c = jax.random.uniform(keys[5], (B3, nb3), jnp.float32, 0.0, 0.5)
    x3c = jax.random.uniform(keys[6], (B3, 2), jnp.float32, 0.1, 0.9)
    out3 = jax.block_until_ready(
        combination(x1c, None, x3c, small_input_bytes=0,
                    max_rows_per_block=16, max_band_cols_per_block=128))
    assert out3.shape == (B3, nb3)
    assert jnp.allclose(out3, _reference(x1c, x3c), rtol=1e-5, atol=1e-5)

    # Case 4: narrow bands (<128) -> lane pad to 128; row tile found as a
    # divisor of B (multiple of 8), so no batch padding and no boundary block.
    B4, nb4 = 40, 96
    x1d = jax.random.uniform(keys[7], (B4, nb4), jnp.float32, 0.0, 0.5)
    x3d = jax.random.uniform(keys[0], (B4, 2), jnp.float32, 0.1, 0.9)
    out4 = jax.block_until_ready(
        combination(x1d, None, x3d, small_input_bytes=0, max_rows_per_block=16))
    assert out4.shape == (B4, nb4)
    assert jnp.allclose(out4, _reference(x1d, x3d), rtol=1e-5, atol=1e-5)

    print("KERNEL_OK")
</pallas_src>

<mosaic_0001>
module attributes {stable_mosaic.version = 11 : i64} {
  func.func @_combination_kernel(%arg0: i32, %arg1: i32, %arg2: memref<64x256xf32, #tpu.memory_space<vmem>>, %arg3: memref<64x2xf32, #tpu.memory_space<vmem>>, %arg4: memref<64x256xf32, #tpu.memory_space<vmem>>) attributes {dimension_semantics = [#tpu.dimension_semantics<core_parallel>, #tpu.dimension_semantics<arbitrary>], iteration_bounds = array<i64: 1, 1>, scalar_prefetch = 0 : i64, scratch_operands = 0 : i64, tpu.core_type = #tpu.core_type<tc>, window_params = [{transform_indices = @transform_0, window_bounds = array<i64: 64, 256>}, {transform_indices = @transform_1, window_bounds = array<i64: 64, 2>}, {transform_indices = @transform_2, window_bounds = array<i64: 64, 256>}]} {
    %c0 = arith.constant 0 : index
    %c0_0 = arith.constant 0 : index
    %0 = vector.load %arg2[%c0, %c0_0] : memref<64x256xf32, #tpu.memory_space<vmem>>, vector<64x256xf32>
    %c0_1 = arith.constant 0 : index
    %c0_2 = arith.constant 0 : index
    %1 = vector.load %arg3[%c0_1, %c0_2] : memref<64x2xf32, #tpu.memory_space<vmem>>, vector<64x1xf32>
    %c0_3 = arith.constant 0 : index
    %c1 = arith.constant 1 : index
    %2 = vector.load %arg3[%c0_3, %c1] : memref<64x2xf32, #tpu.memory_space<vmem>>, vector<64x1xf32>
    %3 = vector.broadcast %1 : vector<64x1xf32> to vector<64x256xf32>
    %4 = arith.mulf %0, %3 : vector<64x256xf32>
    %5 = vector.broadcast %2 : vector<64x1xf32> to vector<64x256xf32>
    %6 = arith.mulf %0, %5 : vector<64x256xf32>
    %cst = arith.constant 1.000000e+00 : f32
    %7 = vector.broadcast %cst : f32 to vector<64x256xf32>
    %8 = arith.subf %7, %6 : vector<64x256xf32>
    %9 = tpu.reciprocal %8 : vector<64x256xf32> -> vector<64x256xf32>
    %10 = arith.mulf %4, %9 : vector<64x256xf32>
    %c0_4 = arith.constant 0 : index
    %c0_5 = arith.constant 0 : index
    %11 = vector.load %arg4[%c0_4, %c0_5] : memref<64x256xf32, #tpu.memory_space<vmem>>, vector<64x256xf32>
    tpu.vector_store %arg4[%c0_4, %c0_5], %10 {strides = array<i32>} : memref<64x256xf32, #tpu.memory_space<vmem>>, vector<64x256xf32>,
    return
  }
  func.func @transform_0(%arg0: i32, %arg1: i32) -> (i32, i32) {
    %c0_i32 = arith.constant 0 : i32
    return %arg0, %arg1 : i32, i32
  }
  func.func @transform_1(%arg0: i32, %arg1: i32) -> (i32, i32) {
    %c0_i32 = arith.constant 0 : i32
    %c0_i32_0 = arith.constant 0 : i32
    return %arg0, %c0_i32 : i32, i32
  }
  func.func @transform_2(%arg0: i32, %arg1: i32) -> (i32, i32) {
    %c0_i32 = arith.constant 0 : i32
    return %arg0, %arg1 : i32, i32
  }
}

module attributes {stable_mosaic.version = 11 : i64} {
  func.func @_combination_kernel(%arg0: i32, %arg1: i32, %arg2: memref<64x256xf32, #tpu.memory_space<vmem>>, %arg3: memref<64x2xf32, #tpu.memory_space<vmem>>, %arg4: memref<64x256xf32, #tpu.memory_space<vmem>>) attributes {dimension_semantics = [#tpu.dimension_semantics<parallel>, #tpu.dimension_semantics<arbitrary>], iteration_bounds = array<i64: 1, 1>, scalar_prefetch = 0 : i64, scratch_operands = 0 : i64, tpu.core_type = #tpu.core_type<tc>, window_params = [{transform_indices = @transform_0, window_bounds = array<i64: 64, 256>}, {transform_indices = @transform_1, window_bounds = array<i64: 64, 2>}, {transform_indices = @transform_2, window_bounds = array<i64: 64, 256>}]} {
    %c0 = arith.constant 0 : index
    %c0_0 = arith.constant 0 : index
    %0 = vector.load %arg2[%c0, %c0_0] : memref<64x256xf32, #tpu.memory_space<vmem>>, vector<64x256xf32>
    %c0_1 = arith.constant 0 : index
    %c0_2 = arith.constant 0 : index
    %1 = vector.load %arg3[%c0_1, %c0_2] : memref<64x2xf32, #tpu.memory_space<vmem>>, vector<64x1xf32>
    %c0_3 = arith.constant 0 : index
    %c1 = arith.constant 1 : index
    %2 = vector.load %arg3[%c0_3, %c1] : memref<64x2xf32, #tpu.memory_space<vmem>>, vector<64x1xf32>
    %3 = vector.broadcast %1 : vector<64x1xf32> to vector<64x256xf32>
    %4 = arith.mulf %0, %3 : vector<64x256xf32>
    %5 = vector.broadcast %2 : vector<64x1xf32> to vector<64x256xf32>
    %6 = arith.mulf %0, %5 : vector<64x256xf32>
    %cst = arith.constant 1.000000e+00 : f32
    %7 = vector.broadcast %cst : f32 to vector<64x256xf32>
    %8 = arith.subf %7, %6 : vector<64x256xf32>
    %9 = tpu.reciprocal %8 : vector<64x256xf32> -> vector<64x256xf32>
    %10 = arith.mulf %4, %9 : vector<64x256xf32>
    %c0_4 = arith.constant 0 : index
    %c0_5 = arith.constant 0 : index
    %11 = vector.load %arg4[%c0_4, %c0_5] : memref<64x256xf32, #tpu.memory_space<vmem>>, vector<64x256xf32>
    tpu.vector_store %arg4[%c0_4, %c0_5], %10 {strides = array<i32>} : memref<64x256xf32, #tpu.memory_space<vmem>>, vector<64x256xf32>,
    return
  }
  func.func @transform_0(%arg0: i32, %arg1: i32) -> (i32, i32) {
    %c0_i32 = arith.constant 0 : i32
    return %arg0, %arg1 : i32, i32
  }
  func.func @transform_1(%arg0: i32, %arg1: i32) -> (i32, i32) {
    %c0_i32 = arith.constant 0 : i32
    %c0_i32_0 = arith.constant 0 : i32
    return %arg0, %c0_i32 : i32, i32
  }
  func.func @transform_2(%arg0: i32, %arg1: i32) -> (i32, i32) {
    %c0_i32 = arith.constant 0 : i32
    return %arg0, %arg1 : i32, i32
  }
}

</mosaic_0001>

<llo_original>
// kernel: tpu_custom_call.1
$region0: #{tpu_custom_call.1}
  #allocation0 [shape = 'u32[]', space=smem, size = 0x4, offset = 0x4, fixed_abs, tag = 'smem constant byte address 0x4 - core index']
  #allocation1 [shape = 'u32[144,128]{1,0:T(1,128)}', space=vmem, size = 0x12000, scoped, tag = 'internal scratch']
  %s0 = inlined_call_operand.hbm [shape: f32[64,256], index: 0, kind: input, shape index: {}]
  %s1 = inlined_call_operand.vmem [shape: f32[64,2], index: 1, kind: input, shape index: {}]
  %s2 = inlined_call_operand.hbm [shape: f32[64,256], index: 2, kind: output, shape index: {}]
  %s3 = sld [smem:[#allocation0]]
  $region22: #{tpu_custom_call.1} parent=0
    _
  %s5 = ssub.s32 1, %s3
  %s6 = scalar_select 0, %s5, %s3
  $region1: #{tpu_custom_call.1} parent=0
    #allocation2 [shape = 'u8[65536]{0}', space=vmem, size = 0x10000, scoped, tag = 'input window, operand 0, single buffered']
    #allocation3 [shape = 's32[1]{0}', space=sflag, size = 0x4, scoped, tag = 'scoped memory for tpu_custom_call.1']
    #allocation4 [shape = 's32[1]{0}', space=sflag, size = 0x4, scoped, tag = 'scoped memory for tpu_custom_call.1']
    #allocation5 [shape = 'u8[65536]{0}', space=vmem, size = 0x10000, scoped, tag = 'output window, operand 0, single buffered']
    %7 = vsyncpa [#allocation3], 0
    %8 = vsyncpa [#allocation4], 0
    // Predicated region
    $region2: #{tpu_custom_call.1} parent=1 // pred_check
      _
    $region3: #{tpu_custom_call.1} parent=1 // pred_check_branch
      %10 = sbr.rel (0) target = $region5
    $region4: #{tpu_custom_call.1} parent=1 // pred_region
      %s11 = smul.u32 8, %s6
      %s13 = ssub.s32 2048, 2048
      %14 = vsyncadd [#allocation3], %s13
      %s15 = smul.addr %s11, 2
      %s16 = smul.addr %s15, 128
      %s17 = scalar_lea.hbm %s0, %s16
      %s18 = sshll.u32 [#allocation2], 4
      %s19 = int_to_ptr.vmem [resolvable:$true] %s18
      %24 = dma.hbm_to_vmem [thread:$0]  %s17, 2048, %s19, [#allocation3], 256, 256, 16
    $region5: #{tpu_custom_call.1} parent=1 // pred_fallthru
      _
    // Predicated region
    $region6: #{tpu_custom_call.1} parent=1 // pred_check
      _
    $region7: #{tpu_custom_call.1} parent=1 // pred_check_branch
      %26 = sbr.rel (0) target = $region9
    $region8: #{tpu_custom_call.1} parent=1 // pred_region
      %s27 = smul.u32 8, %s6
      %p28 = scmp.lt.s32.totalorder %s27, 7
      %s29 = scalar_select %p28, %s27, 7
      %s30 = smul.addr %s29, 8
      %s31 = scalar_lea.vmem %s1, %s30
      %s32 = smul.u32 8, %s6
    $region9: #{tpu_custom_call.1} parent=1 // pred_fallthru
      _
    // Predicated region
    $region10: #{tpu_custom_call.1} parent=1 // pred_check
      _
    $region11: #{tpu_custom_call.1} parent=1 // pred_check_branch
      %34 = sbr.rel (0) target = $region13
    $region12: #{tpu_custom_call.1} parent=1 // pred_region
      %35 = dma.done [#allocation3], 2048
    $region13: #{tpu_custom_call.1} parent=1 // pred_fallthru
      _
    %s36 = smul.u32 8, %s6
    %p37 = scmp.lt.s32.totalorder %s36, 7
    %s38 = scalar_select %p37, %s36, 7
    %s39 = smul.addr %s38, 8
    %s40 = scalar_lea.vmem %s1, %s39
    %s41 = smul.u32 8, %s6
    %s42 = smul.u32 8, %s6
    %p43 = scmp.lt.s32.totalorder %s42, 7
    %s44 = scalar_select %p43, %s42, 7
    %s45 = smul.addr %s44, 8
    %s46 = scalar_lea.vmem %s1, %s45
    %s47 = smul.u32 8, %s6
    %s48 = smul.u32 8, %s6
    %v49 = vld [vmem:[#allocation2] sm:$0xff]
    %v50 = vld [vmem:[#allocation2 + $0x8] sm:$0xff]
    %v51 = vld [vmem:[#allocation2 + $0x10] sm:$0xff]
    %v52 = vld [vmem:[#allocation2 + $0x18] sm:$0xff]
    %v53 = vld [vmem:[#allocation2 + $0x20] sm:$0xff]
    %v54 = vld [vmem:[#allocation2 + $0x28] sm:$0xff]
    %v55 = vld [vmem:[#allocation2 + $0x30] sm:$0xff]
    %v56 = vld [vmem:[#allocation2 + $0x38] sm:$0xff]
    %v57 = vld [vmem:[#allocation2 + $0x40] sm:$0xff]
    %v58 = vld [vmem:[#allocation2 + $0x48] sm:$0xff]
    %v59 = vld [vmem:[#allocation2 + $0x50] sm:$0xff]
    %v60 = vld [vmem:[#allocation2 + $0x58] sm:$0xff]
    %v61 = vld [vmem:[#allocation2 + $0x60] sm:$0xff]
    %v62 = vld [vmem:[#allocation2 + $0x68] sm:$0xff]
    %v63 = vld [vmem:[#allocation2 + $0x70] sm:$0xff]
    %v64 = vld [vmem:[#allocation2 + $0x78] sm:$0xff]
    %v65 = vld [vmem:[%s46] sm:$0xff]
    %v66 = vld [vmem:[%s46 + $0x8] sm:$0xff]
    %v67 = vld [vmem:[%s46 + $0x10] sm:$0xff]
    %v68 = vld [vmem:[%s46 + $0x18] sm:$0xff]
    %v69 = vld [vmem:[%s46 + $0x20] sm:$0xff]
    %v70 = vld [vmem:[%s46 + $0x28] sm:$0xff]
    %v71 = vld [vmem:[%s46 + $0x30] sm:$0xff]
    %v72 = vld [vmem:[%s46 + $0x38] sm:$0xff]
    %74 = vset.pattern.permute.xlu0 0
    %75 = vperm.xlu0 %74, %v65
    %v76 = vpop.permute.xlu0 %75
    %79 = vset.pattern.permute.xlu0 0
    %80 = vperm.xlu0 %79, %v66
    %v81 = vpop.permute.xlu0 %80
    %84 = vset.pattern.permute.xlu0 0
    %85 = vperm.xlu0 %84, %v67
    %v86 = vpop.permute.xlu0 %85
    %89 = vset.pattern.permute.xlu0 0
    %90 = vperm.xlu0 %89, %v68
    %v91 = vpop.permute.xlu0 %90
    %94 = vset.pattern.permute.xlu0 0
    %95 = vperm.xlu0 %94, %v69
    %v96 = vpop.permute.xlu0 %95
    %99 = vset.pattern.permute.xlu0 0
    %100 = vperm.xlu0 %99, %v70
    %v101 = vpop.permute.xlu0 %100
    %104 = vset.pattern.permute.xlu0 0
    %105 = vperm.xlu0 %104, %v71
    %v106 = vpop.permute.xlu0 %105
    %109 = vset.pattern.permute.xlu0 0
    %110 = vperm.xlu0 %109, %v72
    %v111 = vpop.permute.xlu0 %110
    %v113 = vmul.f32 %v49, %v76
    %v114 = vmul.f32 %v50, %v76
    %v115 = vmul.f32 %v51, %v81
    %v116 = vmul.f32 %v52, %v81
    %v117 = vmul.f32 %v53, %v86
    %v118 = vmul.f32 %v54, %v86
    %v119 = vmul.f32 %v55, %v91
    %v120 = vmul.f32 %v56, %v91
    %v121 = vmul.f32 %v57, %v96
    %v122 = vmul.f32 %v58, %v96
    %v123 = vmul.f32 %v59, %v101
    %v124 = vmul.f32 %v60, %v101
    %v125 = vmul.f32 %v61, %v106
    %v126 = vmul.f32 %v62, %v106
    %v127 = vmul.f32 %v63, %v111
    %v128 = vmul.f32 %v64, %v111
    %129 = vset.pattern.permute.xlu0 1
    %130 = vperm.xlu0 %129, %v65
    %v131 = vpop.permute.xlu0 %130
    %133 = vset.pattern.permute.xlu0 1
    %134 = vperm.xlu0 %133, %v66
    %v135 = vpop.permute.xlu0 %134
    %137 = vset.pattern.permute.xlu0 1
    %138 = vperm.xlu0 %137, %v67
    %v139 = vpop.permute.xlu0 %138
    %141 = vset.pattern.permute.xlu0 1
    %142 = vperm.xlu0 %141, %v68
    %v143 = vpop.permute.xlu0 %142
    %145 = vset.pattern.permute.xlu0 1
    %146 = vperm.xlu0 %145, %v69
    %v147 = vpop.permute.xlu0 %146
    %149 = vset.pattern.permute.xlu0 1
    %150 = vperm.xlu0 %149, %v70
    %v151 = vpop.permute.xlu0 %150
    %153 = vset.pattern.permute.xlu0 1
    %154 = vperm.xlu0 %153, %v71
    %v155 = vpop.permute.xlu0 %154
    %157 = vset.pattern.permute.xlu0 1
    %158 = vperm.xlu0 %157, %v72
    %v159 = vpop.permute.xlu0 %158
    %v161 = vmul.f32 %v49, %v131
    %v162 = vmul.f32 %v50, %v131
    %v163 = vmul.f32 %v51, %v135
    %v164 = vmul.f32 %v52, %v135
    %v165 = vmul.f32 %v53, %v139
    %v166 = vmul.f32 %v54, %v139
    %v167 = vmul.f32 %v55, %v143
    %v168 = vmul.f32 %v56, %v143
    %v169 = vmul.f32 %v57, %v147
    %v170 = vmul.f32 %v58, %v147
    %v171 = vmul.f32 %v59, %v151
    %v172 = vmul.f32 %v60, %v151
    %v173 = vmul.f32 %v61, %v155
    %v174 = vmul.f32 %v62, %v155
    %v175 = vmul.f32 %v63, %v159
    %v176 = vmul.f32 %v64, %v159
    %v177 = vsub.f32 1.0, %v161
    %v178 = vsub.f32 1.0, %v162
    %v179 = vsub.f32 1.0, %v163
    %v180 = vsub.f32 1.0, %v164
    %v181 = vsub.f32 1.0, %v165
    %v182 = vsub.f32 1.0, %v166
    %v183 = vsub.f32 1.0, %v167
    %v184 = vsub.f32 1.0, %v168
    %v185 = vsub.f32 1.0, %v169
    %v186 = vsub.f32 1.0, %v170
    %v187 = vsub.f32 1.0, %v171
    %v188 = vsub.f32 1.0, %v172
    %v189 = vsub.f32 1.0, %v173
    %v190 = vsub.f32 1.0, %v174
    %v191 = vsub.f32 1.0, %v175
    %v192 = vsub.f32 1.0, %v176
    %v193 = vrcp.pop %v177
    %v194 = vrcp.pop %v178
    %v195 = vrcp.pop %v179
    %v196 = vrcp.pop %v180
    %v197 = vrcp.pop %v181
    %v198 = vrcp.pop %v182
    %v199 = vrcp.pop %v183
    %v200 = vrcp.pop %v184
    %v201 = vrcp.pop %v185
    %v202 = vrcp.pop %v186
    %v203 = vrcp.pop %v187
    %v204 = vrcp.pop %v188
    %v205 = vrcp.pop %v189
    %v206 = vrcp.pop %v190
    %v207 = vrcp.pop %v191
    %v208 = vrcp.pop %v192
    %v209 = vmul.f32 %v113, %v193
    %v210 = vmul.f32 %v114, %v194
    %v211 = vmul.f32 %v115, %v195
    %v212 = vmul.f32 %v116, %v196
    %v213 = vmul.f32 %v117, %v197
    %v214 = vmul.f32 %v118, %v198
    %v215 = vmul.f32 %v119, %v199
    %v216 = vmul.f32 %v120, %v200
    %v217 = vmul.f32 %v121, %v201
    %v218 = vmul.f32 %v122, %v202
    %v219 = vmul.f32 %v123, %v203
    %v220 = vmul.f32 %v124, %v204
    %v221 = vmul.f32 %v125, %v205
    %v222 = vmul.f32 %v126, %v206
    %v223 = vmul.f32 %v127, %v207
    %v224 = vmul.f32 %v128, %v208
    %225 = vst [vmem:[#allocation5] sm:$0xff] %v209
    %226 = vst [vmem:[#allocation5 + $0x8] sm:$0xff] %v210
    %227 = vst [vmem:[#allocation5 + $0x10] sm:$0xff] %v211
    %228 = vst [vmem:[#allocation5 + $0x18] sm:$0xff] %v212
    %229 = vst [vmem:[#allocation5 + $0x20] sm:$0xff] %v213
    %230 = vst [vmem:[#allocation5 + $0x28] sm:$0xff] %v214
    %231 = vst [vmem:[#allocation5 + $0x30] sm:$0xff] %v215
    %232 = vst [vmem:[#allocation5 + $0x38] sm:$0xff] %v216
    %233 = vst [vmem:[#allocation5 + $0x40] sm:$0xff] %v217
    %234 = vst [vmem:[#allocation5 + $0x48] sm:$0xff] %v218
    %235 = vst [vmem:[#allocation5 + $0x50] sm:$0xff] %v219
    %236 = vst [vmem:[#allocation5 + $0x58] sm:$0xff] %v220
    %237 = vst [vmem:[#allocation5 + $0x60] sm:$0xff] %v221
    %238 = vst [vmem:[#allocation5 + $0x68] sm:$0xff] %v222
    %239 = vst [vmem:[#allocation5 + $0x70] sm:$0xff] %v223
    %240 = vst [vmem:[#allocation5 + $0x78] sm:$0xff] %v224
    // Predicated region
    $region14: #{tpu_custom_call.1} parent=1 // pred_check
      _
    $region15: #{tpu_custom_call.1} parent=1 // pred_check_branch
      %242 = sbr.rel (0) target = $region17
    $region16: #{tpu_custom_call.1} parent=1 // pred_region
      %s243 = smul.u32 8, %s6
      %s245 = ssub.s32 2048, 2048
      %246 = vsyncadd [#allocation4], %s245
      %s247 = smul.addr %s243, 2
      %s248 = smul.addr %s247, 128
      %s249 = scalar_lea.hbm %s2, %s248
      %s250 = sshll.u32 [#allocation5], 4
      %s251 = int_to_ptr.vmem [resolvable:$true] %s250
      %256 = dma.vmem_to_hbm [thread:$0]  %s251, 2048, %s249, [#allocation4], 256, 256, 16
    $region17: #{tpu_custom_call.1} parent=1 // pred_fallthru
      _
    // Predicated region
    $region18: #{tpu_custom_call.1} parent=1 // pred_check
      _
    $region19: #{tpu_custom_call.1} parent=1 // pred_check_branch
      %258 = sbr.rel (0) target = $region21
    $region20: #{tpu_custom_call.1} parent=1 // pred_region
      %259 = dma.done [#allocation4], 2048
    $region21: #{tpu_custom_call.1} parent=1 // pred_fallthru
      _
    %260 = vsyncpa [#allocation3], 1
    %261 = vsyncpa [#allocation4], 1

// kernel: tpu_custom_call.1
$region0: #{tpu_custom_call.1}
  #allocation0 [shape = 'u32[]', space=smem, size = 0x4, offset = 0x4, fixed_abs, tag = 'smem constant byte address 0x4 - core index']
  #allocation1 [shape = 'u32[144,128]{1,0:T(1,128)}', space=vmem, size = 0x12000, scoped, tag = 'internal scratch']
  %s0 = inlined_call_operand.hbm [shape: f32[64,256], index: 0, kind: input, shape index: {}]
  %s1 = inlined_call_operand.vmem [shape: f32[64,2], index: 1, kind: input, shape index: {}]
  %s2 = inlined_call_operand.hbm [shape: f32[64,256], index: 2, kind: output, shape index: {}]
  %s3 = sld [smem:[#allocation0]]
  $region22: #{tpu_custom_call.1} parent=0
    _
  %s5 = ssub.s32 1, %s3
  %s6 = scalar_select 0, %s5, %s3
  $region1: #{tpu_custom_call.1} parent=0
    #allocation2 [shape = 'u8[65536]{0}', space=vmem, size = 0x10000, scoped, tag = 'input window, operand 0, single buffered']
    #allocation3 [shape = 's32[1]{0}', space=sflag, size = 0x4, scoped, tag = 'scoped memory for tpu_custom_call.1']
    #allocation4 [shape = 's32[1]{0}', space=sflag, size = 0x4, scoped, tag = 'scoped memory for tpu_custom_call.1']
    #allocation5 [shape = 'u8[65536]{0}', space=vmem, size = 0x10000, scoped, tag = 'output window, operand 0, single buffered']
    %7 = vsyncpa [#allocation3], 0
    %8 = vsyncpa [#allocation4], 0
    // Predicated region
    $region2: #{tpu_custom_call.1} parent=1 // pred_check
      _
    $region3: #{tpu_custom_call.1} parent=1 // pred_check_branch
      %10 = sbr.rel (0) target = $region5
    $region4: #{tpu_custom_call.1} parent=1 // pred_region
      %s12 = ssub.s32 2048, 2048
      %13 = vsyncadd [#allocation3], %s12
      %s14 = sshll.u32 [#allocation2], 4
      %s15 = int_to_ptr.vmem [resolvable:$true] %s14
      %20 = dma.hbm_to_vmem [thread:$0]  %s0, 2048, %s15, [#allocation3], 256, 256, 16
    $region5: #{tpu_custom_call.1} parent=1 // pred_fallthru
      _
    // Predicated region
    $region6: #{tpu_custom_call.1} parent=1 // pred_check
      _
    $region7: #{tpu_custom_call.1} parent=1 // pred_check_branch
      %22 = sbr.rel (0) target = $region9
    $region8: #{tpu_custom_call.1} parent=1 // pred_region
      _
    $region9: #{tpu_custom_call.1} parent=1 // pred_fallthru
      _
    // Predicated region
    $region10: #{tpu_custom_call.1} parent=1 // pred_check
      _
    $region11: #{tpu_custom_call.1} parent=1 // pred_check_branch
      %24 = sbr.rel (0) target = $region13
    $region12: #{tpu_custom_call.1} parent=1 // pred_region
      %25 = dma.done [#allocation3], 2048
    $region13: #{tpu_custom_call.1} parent=1 // pred_fallthru
      _
    %v26 = vld [vmem:[#allocation2] sm:$0xff]
    %v27 = vld [vmem:[#allocation2 + $0x8] sm:$0xff]
    %v28 = vld [vmem:[#allocation2 + $0x10] sm:$0xff]
    %v29 = vld [vmem:[#allocation2 + $0x18] sm:$0xff]
    %v30 = vld [vmem:[#allocation2 + $0x20] sm:$0xff]
    %v31 = vld [vmem:[#allocation2 + $0x28] sm:$0xff]
    %v32 = vld [vmem:[#allocation2 + $0x30] sm:$0xff]
    %v33 = vld [vmem:[#allocation2 + $0x38] sm:$0xff]
    %v34 = vld [vmem:[#allocation2 + $0x40] sm:$0xff]
    %v35 = vld [vmem:[#allocation2 + $0x48] sm:$0xff]
    %v36 = vld [vmem:[#allocation2 + $0x50] sm:$0xff]
    %v37 = vld [vmem:[#allocation2 + $0x58] sm:$0xff]
    %v38 = vld [vmem:[#allocation2 + $0x60] sm:$0xff]
    %v39 = vld [vmem:[#allocation2 + $0x68] sm:$0xff]
    %v40 = vld [vmem:[#allocation2 + $0x70] sm:$0xff]
    %v41 = vld [vmem:[#allocation2 + $0x78] sm:$0xff]
    %v42 = vld [vmem:[%s1] sm:$0xff]
    %v43 = vld [vmem:[%s1 + $0x8] sm:$0xff]
    %v44 = vld [vmem:[%s1 + $0x10] sm:$0xff]
    %v45 = vld [vmem:[%s1 + $0x18] sm:$0xff]
    %v46 = vld [vmem:[%s1 + $0x20] sm:$0xff]
    %v47 = vld [vmem:[%s1 + $0x28] sm:$0xff]
    %v48 = vld [vmem:[%s1 + $0x30] sm:$0xff]
    %v49 = vld [vmem:[%s1 + $0x38] sm:$0xff]
    %51 = vset.pattern.permute.xlu0 0
    %52 = vperm.xlu0 %51, %v42
    %v53 = vpop.permute.xlu0 %52
    %56 = vset.pattern.permute.xlu0 0
    %57 = vperm.xlu0 %56, %v43
    %v58 = vpop.permute.xlu0 %57
    %61 = vset.pattern.permute.xlu0 0
    %62 = vperm.xlu0 %61, %v44
    %v63 = vpop.permute.xlu0 %62
    %66 = vset.pattern.permute.xlu0 0
    %67 = vperm.xlu0 %66, %v45
    %v68 = vpop.permute.xlu0 %67
    %71 = vset.pattern.permute.xlu0 0
    %72 = vperm.xlu0 %71, %v46
    %v73 = vpop.permute.xlu0 %72
    %76 = vset.pattern.permute.xlu0 0
    %77 = vperm.xlu0 %76, %v47
    %v78 = vpop.permute.xlu0 %77
    %81 = vset.pattern.permute.xlu0 0
    %82 = vperm.xlu0 %81, %v48
    %v83 = vpop.permute.xlu0 %82
    %86 = vset.pattern.permute.xlu0 0
    %87 = vperm.xlu0 %86, %v49
    %v88 = vpop.permute.xlu0 %87
    %v90 = vmul.f32 %v26, %v53
    %v91 = vmul.f32 %v27, %v53
    %v92 = vmul.f32 %v28, %v58
    %v93 = vmul.f32 %v29, %v58
    %v94 = vmul.f32 %v30, %v63
    %v95 = vmul.f32 %v31, %v63
    %v96 = vmul.f32 %v32, %v68
    %v97 = vmul.f32 %v33, %v68
    %v98 = vmul.f32 %v34, %v73
    %v99 = vmul.f32 %v35, %v73
    %v100 = vmul.f32 %v36, %v78
    %v101 = vmul.f32 %v37, %v78
    %v102 = vmul.f32 %v38, %v83
    %v103 = vmul.f32 %v39, %v83
    %v104 = vmul.f32 %v40, %v88
    %v105 = vmul.f32 %v41, %v88
    %106 = vset.pattern.permute.xlu0 1
    %107 = vperm.xlu0 %106, %v42
    %v108 = vpop.permute.xlu0 %107
    %110 = vset.pattern.permute.xlu0 1
    %111 = vperm.xlu0 %110, %v43
    %v112 = vpop.permute.xlu0 %111
    %114 = vset.pattern.permute.xlu0 1
    %115 = vperm.xlu0 %114, %v44
    %v116 = vpop.permute.xlu0 %115
    %118 = vset.pattern.permute.xlu0 1
    %119 = vperm.xlu0 %118, %v45
    %v120 = vpop.permute.xlu0 %119
    %122 = vset.pattern.permute.xlu0 1
    %123 = vperm.xlu0 %122, %v46
    %v124 = vpop.permute.xlu0 %123
    %126 = vset.pattern.permute.xlu0 1
    %127 = vperm.xlu0 %126, %v47
    %v128 = vpop.permute.xlu0 %127
    %130 = vset.pattern.permute.xlu0 1
    %131 = vperm.xlu0 %130, %v48
    %v132 = vpop.permute.xlu0 %131
    %134 = vset.pattern.permute.xlu0 1
    %135 = vperm.xlu0 %134, %v49
    %v136 = vpop.permute.xlu0 %135
    %v138 = vmul.f32 %v26, %v108
    %v139 = vmul.f32 %v27, %v108
    %v140 = vmul.f32 %v28, %v112
    %v141 = vmul.f32 %v29, %v112
    %v142 = vmul.f32 %v30, %v116
    %v143 = vmul.f32 %v31, %v116
    %v144 = vmul.f32 %v32, %v120
    %v145 = vmul.f32 %v33, %v120
    %v146 = vmul.f32 %v34, %v124
    %v147 = vmul.f32 %v35, %v124
    %v148 = vmul.f32 %v36, %v128
    %v149 = vmul.f32 %v37, %v128
    %v150 = vmul.f32 %v38, %v132
    %v151 = vmul.f32 %v39, %v132
    %v152 = vmul.f32 %v40, %v136
    %v153 = vmul.f32 %v41, %v136
    %v154 = vsub.f32 1.0, %v138
    %v155 = vsub.f32 1.0, %v139
    %v156 = vsub.f32 1.0, %v140
    %v157 = vsub.f32 1.0, %v141
    %v158 = vsub.f32 1.0, %v142
    %v159 = vsub.f32 1.0, %v143
    %v160 = vsub.f32 1.0, %v144
    %v161 = vsub.f32 1.0, %v145
    %v162 = vsub.f32 1.0, %v146
    %v163 = vsub.f32 1.0, %v147
    %v164 = vsub.f32 1.0, %v148
    %v165 = vsub.f32 1.0, %v149
    %v166 = vsub.f32 1.0, %v150
    %v167 = vsub.f32 1.0, %v151
    %v168 = vsub.f32 1.0, %v152
    %v169 = vsub.f32 1.0, %v153
    %v170 = vrcp.pop %v154
    %v171 = vrcp.pop %v155
    %v172 = vrcp.pop %v156
    %v173 = vrcp.pop %v157
    %v174 = vrcp.pop %v158
    %v175 = vrcp.pop %v159
    %v176 = vrcp.pop %v160
    %v177 = vrcp.pop %v161
    %v178 = vrcp.pop %v162
    %v179 = vrcp.pop %v163
    %v180 = vrcp.pop %v164
    %v181 = vrcp.pop %v165
    %v182 = vrcp.pop %v166
    %v183 = vrcp.pop %v167
    %v184 = vrcp.pop %v168
    %v185 = vrcp.pop %v169
    %v186 = vmul.f32 %v90, %v170
    %v187 = vmul.f32 %v91, %v171
    %v188 = vmul.f32 %v92, %v172
    %v189 = vmul.f32 %v93, %v173
    %v190 = vmul.f32 %v94, %v174
    %v191 = vmul.f32 %v95, %v175
    %v192 = vmul.f32 %v96, %v176
    %v193 = vmul.f32 %v97, %v177
    %v194 = vmul.f32 %v98, %v178
    %v195 = vmul.f32 %v99, %v179
    %v196 = vmul.f32 %v100, %v180
    %v197 = vmul.f32 %v101, %v181
    %v198 = vmul.f32 %v102, %v182
    %v199 = vmul.f32 %v103, %v183
    %v200 = vmul.f32 %v104, %v184
    %v201 = vmul.f32 %v105, %v185
    %202 = vst [vmem:[#allocation5] sm:$0xff] %v186
    %203 = vst [vmem:[#allocation5 + $0x8] sm:$0xff] %v187
    %204 = vst [vmem:[#allocation5 + $0x10] sm:$0xff] %v188
    %205 = vst [vmem:[#allocation5 + $0x18] sm:$0xff] %v189
    %206 = vst [vmem:[#allocation5 + $0x20] sm:$0xff] %v190
    %207 = vst [vmem:[#allocation5 + $0x28] sm:$0xff] %v191
    %208 = vst [vmem:[#allocation5 + $0x30] sm:$0xff] %v192
    %209 = vst [vmem:[#allocation5 + $0x38] sm:$0xff] %v193
    %210 = vst [vmem:[#allocation5 + $0x40] sm:$0xff] %v194
    %211 = vst [vmem:[#allocation5 + $0x48] sm:$0xff] %v195
    %212 = vst [vmem:[#allocation5 + $0x50] sm:$0xff] %v196
    %213 = vst [vmem:[#allocation5 + $0x58] sm:$0xff] %v197
    %214 = vst [vmem:[#allocation5 + $0x60] sm:$0xff] %v198
    %215 = vst [vmem:[#allocation5 + $0x68] sm:$0xff] %v199
    %216 = vst [vmem:[#allocation5 + $0x70] sm:$0xff] %v200
    %217 = vst [vmem:[#allocation5 + $0x78] sm:$0xff] %v201
    // Predicated region
    $region14: #{tpu_custom_call.1} parent=1 // pred_check
      _
    $region15: #{tpu_custom_call.1} parent=1 // pred_check_branch
      %219 = sbr.rel (0) target = $region17
    $region16: #{tpu_custom_call.1} parent=1 // pred_region
      %s221 = ssub.s32 2048, 2048
      %222 = vsyncadd [#allocation4], %s221
      %s223 = sshll.u32 [#allocation5], 4
      %s224 = int_to_ptr.vmem [resolvable:$true] %s223
      %229 = dma.vmem_to_hbm [thread:$0]  %s224, 2048, %s2, [#allocation4], 256, 256, 16
    $region17: #{tpu_custom_call.1} parent=1 // pred_fallthru
      _
    // Predicated region
    $region18: #{tpu_custom_call.1} parent=1 // pred_check
      _
    $region19: #{tpu_custom_call.1} parent=1 // pred_check_branch
      %231 = sbr.rel (0) target = $region21
    $region20: #{tpu_custom_call.1} parent=1 // pred_region
      %232 = dma.done [#allocation4], 2048
    $region21: #{tpu_custom_call.1} parent=1 // pred_fallthru
      _
    %233 = vsyncpa [#allocation3], 1
    %234 = vsyncpa [#allocation4], 1

</llo_original>
